<compile_context>
chip_gen: v7x
topology: tpu7x:2x2x1
jax: 0.10.0
libtpu: 0.0.40
codegen_flags: <defaults>
</compile_context>

<pallas_src>
import jax
import jax.numpy as jnp
from jax.experimental import pallas as pl
from jax.experimental.pallas import tpu as pltpu


def _copy_kernel(x_ref, o_ref):
    # Pure lane-dense block copy; all "unflatten" logic is metadata-only
    # reshapes in the wrapper (byte order is identical to torch .view()).
    o_ref[...] = x_ref[...]


def _pick_lane_width(total: int) -> int:
    # Largest multiple of 128 that divides the flat element count, capped at
    # 1024 so the double-buffered in+out footprint stays well under the
    # smallest scoped-VMEM default (v5e: 16 MiB).
    for cand in (1024, 512, 256, 128):
        if total % cand == 0:
            return cand
    return 0  # caller falls back to a single full-array block


def _pick_tile_rows(rows: int, sublane_mult: int) -> int:
    # Prefer the largest divisor of `rows` (<= 512) that is a multiple of the
    # dtype's sublane packing; otherwise fall back to the full extent, which
    # is always a legal block dimension.
    cap = min(rows, 512)
    for mult in (sublane_mult, 8):
        t = (cap // mult) * mult
        while t >= mult:
            if rows % t == 0:
                return t
            t -= mult
    return rows


def unflatten(x: jax.Array, channels: int = 4) -> jax.Array:
    b, h, w = x.shape
    assert w % channels == 0, "w must be divisible by channels (same as torch view)"
    wc = w // channels
    out_shape = (b, channels, h, wc)

    total = b * h * w
    itemsize = jnp.dtype(x.dtype).itemsize
    sublane_mult = {4: 8, 2: 16, 1: 32}.get(itemsize, 8)

    lane = _pick_lane_width(total)
    if lane == 0:
        # Fallback for odd sizes: present the whole array as one full-extent
        # 2-D block (full dims are always legal, no (8,128) requirement).
        rows, lane = b * h, w
        tile_rows = rows
        grid = (1,)
    else:
        rows = total // lane
        tile_rows = _pick_tile_rows(rows, sublane_mult)
        grid = (rows // tile_rows,)

    # Metadata-only reshape: same row-major bytes as the (b, h, w) input.
    flat_in = jnp.reshape(x, (rows, lane))

    flat_out = pl.pallas_call(
        _copy_kernel,
        out_shape=jax.ShapeDtypeStruct((rows, lane), x.dtype),
        grid_spec=pltpu.PrefetchScalarGridSpec(
            num_scalar_prefetch=0,
            grid=grid,
            in_specs=[pl.BlockSpec((tile_rows, lane), lambda i: (i, 0))],
            out_specs=pl.BlockSpec((tile_rows, lane), lambda i: (i, 0)),
        ),
        compiler_params=pltpu.CompilerParams(
            # Single flattened axis; "parallel" lets v7x shard the copy across
            # its 2 TensorCores. No further semantics tuning is worthwhile.
            dimension_semantics=("parallel",),
        ),
    )(flat_in)

    # Metadata-only reshape to the torch .view(b, C, h, w // C) layout.
    return jnp.reshape(flat_out, out_shape)


if __name__ == "__main__":
    key = jax.random.PRNGKey(0)

    # Primary check: the module's nominal small shape.
    B, H, W = 2, 16, 16
    CHANNELS = 4
    x = jax.random.normal(key, (B, H, W), dtype=jnp.float32)
    out = jax.block_until_ready(unflatten(x, channels=CHANNELS))
    ref = jnp.reshape(x, (B, CHANNELS, H, W // CHANNELS))
    assert out.shape == (B, CHANNELS, H, W // CHANNELS), out.shape
    assert out.dtype == x.dtype
    assert bool(jnp.array_equal(out, ref)), "mismatch vs reference reshape (f32 small)"

    # Secondary check: larger shape that exercises the multi-block tiled path.
    B2, H2, W2 = 4, 256, 1024
    x2 = jax.random.normal(jax.random.PRNGKey(0), (B2, H2, W2), dtype=jnp.float32)
    out2 = jax.block_until_ready(unflatten(x2, channels=CHANNELS))
    ref2 = jnp.reshape(x2, (B2, CHANNELS, H2, W2 // CHANNELS))
    assert bool(jnp.array_equal(out2, ref2)), "mismatch vs reference reshape (f32 large)"

    # Dtype check: bf16 (different sublane packing).
    x3 = x.astype(jnp.bfloat16)
    out3 = jax.block_until_ready(unflatten(x3, channels=CHANNELS))
    ref3 = jnp.reshape(x3, (B, CHANNELS, H, W // CHANNELS))
    assert out3.dtype == jnp.bfloat16
    assert bool(jnp.array_equal(out3, ref3)), "mismatch vs reference reshape (bf16)"

    print("KERNEL_OK")
</pallas_src>

<mosaic_0001>
module attributes {stable_mosaic.version = 11 : i64} {
  func.func @_copy_kernel(%arg0: i32, %arg1: memref<1x512xf32, #tpu.memory_space<vmem>>, %arg2: memref<1x512xf32, #tpu.memory_space<vmem>>) attributes {dimension_semantics = [#tpu.dimension_semantics<parallel>], iteration_bounds = array<i64: 1>, scalar_prefetch = 0 : i64, scratch_operands = 0 : i64, tpu.core_type = #tpu.core_type<tc>, window_params = [{transform_indices = @transform_0, window_bounds = array<i64: 1, 512>}, {transform_indices = @transform_1, window_bounds = array<i64: 1, 512>}]} {
    %c0 = arith.constant 0 : index
    %c0_0 = arith.constant 0 : index
    %0 = vector.load %arg1[%c0, %c0_0] : memref<1x512xf32, #tpu.memory_space<vmem>>, vector<1x512xf32>
    %c0_1 = arith.constant 0 : index
    %c0_2 = arith.constant 0 : index
    %1 = vector.load %arg2[%c0_1, %c0_2] : memref<1x512xf32, #tpu.memory_space<vmem>>, vector<1x512xf32>
    tpu.vector_store %arg2[%c0_1, %c0_2], %0 {strides = array<i32>} : memref<1x512xf32, #tpu.memory_space<vmem>>, vector<1x512xf32>,
    return
  }
  func.func @transform_0(%arg0: i32) -> (i32, i32) {
    %c0_i32 = arith.constant 0 : i32
    %c0_i32_0 = arith.constant 0 : i32
    return %arg0, %c0_i32 : i32, i32
  }
  func.func @transform_1(%arg0: i32) -> (i32, i32) {
    %c0_i32 = arith.constant 0 : i32
    %c0_i32_0 = arith.constant 0 : i32
    return %arg0, %c0_i32 : i32, i32
  }
}

</mosaic_0001>

<llo_original>
// kernel: tpu_custom_call.1
$region0: #{tpu_custom_call.1}
  #allocation0 [shape = 'u32[]', space=smem, size = 0x4, offset = 0x4, fixed_abs, tag = 'smem constant byte address 0x4 - core index']
  #allocation1 [shape = 'u32[144,128]{1,0:T(1,128)}', space=vmem, size = 0x12000, scoped, tag = 'internal scratch']
  %s0 = inlined_call_operand.hbm [shape: f32[1,512], index: 0, kind: input, shape index: {}]
  %s1 = inlined_call_operand.hbm [shape: f32[1,512], index: 1, kind: output, shape index: {}]
  %s2 = sld [smem:[#allocation0]]
  $region18: #{tpu_custom_call.1} parent=0
    _
  %s4 = ssub.s32 1, %s2
  %s5 = scalar_select 0, %s4, %s2
  $region1: #{tpu_custom_call.1} parent=0
    #allocation2 [shape = 'u8[2048]{0}', space=vmem, size = 0x800, scoped, tag = 'input window, operand 0, single buffered']
    #allocation3 [shape = 's32[1]{0}', space=sflag, size = 0x4, scoped, tag = 'scoped memory for tpu_custom_call.1']
    #allocation4 [shape = 's32[1]{0}', space=sflag, size = 0x4, scoped, tag = 'scoped memory for tpu_custom_call.1']
    #allocation5 [shape = 'u8[2048]{0}', space=vmem, size = 0x800, scoped, tag = 'output window, operand 0, single buffered']
    %6 = vsyncpa [#allocation3], 0
    %7 = vsyncpa [#allocation4], 0
    // Predicated region
    $region2: #{tpu_custom_call.1} parent=1 // pred_check
      _
    $region3: #{tpu_custom_call.1} parent=1 // pred_check_branch
      %9 = sbr.rel (0) target = $region5
    $region4: #{tpu_custom_call.1} parent=1 // pred_region
      %s11 = ssub.s32 64, 64
      %12 = vsyncadd [#allocation3], %s11
      %s14 = sshll.u32 [#allocation2], 4
      %s15 = int_to_ptr.vmem [resolvable:$true] %s14
      %17 = dma.hbm_to_vmem [thread:$0]  %s0, 64, %s15, [#allocation3]
    $region5: #{tpu_custom_call.1} parent=1 // pred_fallthru
      _
    // Predicated region
    $region6: #{tpu_custom_call.1} parent=1 // pred_check
      _
    $region7: #{tpu_custom_call.1} parent=1 // pred_check_branch
      %19 = sbr.rel (0) target = $region9
    $region8: #{tpu_custom_call.1} parent=1 // pred_region
      %20 = dma.done [#allocation3], 64
    $region9: #{tpu_custom_call.1} parent=1 // pred_fallthru
      _
    %v21 = vld [vmem:[#allocation2] sm:$0xf]
    %v22 = vlaneseq
    %vm23 = vcmp.ge.s32.totalorder %v22, 0
    %vm24 = vcmp.lt.s32.totalorder %v22, 512
    %vm25 = vmand %vm23, %vm24
    %26 = vst.msk [vmem:[#allocation5] sm:$0xf] %vm25, %v21
    // Predicated region
    $region10: #{tpu_custom_call.1} parent=1 // pred_check
      _
    $region11: #{tpu_custom_call.1} parent=1 // pred_check_branch
      %28 = sbr.rel (0) target = $region13
    $region12: #{tpu_custom_call.1} parent=1 // pred_region
      %s30 = ssub.s32 64, 64
      %31 = vsyncadd [#allocation4], %s30
      %s33 = sshll.u32 [#allocation5], 4
      %s34 = int_to_ptr.vmem [resolvable:$true] %s33
      %36 = dma.vmem_to_hbm [thread:$0]  %s34, 64, %s1, [#allocation4]
    $region13: #{tpu_custom_call.1} parent=1 // pred_fallthru
      _
    // Predicated region
    $region14: #{tpu_custom_call.1} parent=1 // pred_check
      _
    $region15: #{tpu_custom_call.1} parent=1 // pred_check_branch
      %38 = sbr.rel (0) target = $region17
    $region16: #{tpu_custom_call.1} parent=1 // pred_region
      %39 = dma.done [#allocation4], 64
    $region17: #{tpu_custom_call.1} parent=1 // pred_fallthru
      _
    %40 = vsyncpa [#allocation3], 1
    %41 = vsyncpa [#allocation4], 1

</llo_original>
